<compile_context>
chip_gen: v7x
topology: tpu7x:2x2x1
jax: 0.10.0
libtpu: 0.0.40
codegen_flags: <defaults>
</compile_context>

<pallas_src>
import functools

import jax
import jax.numpy as jnp
from jax.experimental import pallas as pl
from jax.experimental.pallas import tpu as pltpu

LANE = 128  # TPU lane width; pad hidden / (internal) output dims to this.


def _round_up(n, m):
    return ((n + m - 1) // m) * m


# --------------------------------------------------------------------------
# Kernel
# --------------------------------------------------------------------------
def mlp_kernel(x_ref, w1_ref, b1_ref, w2_ref, b2_ref, w3_ref, b3_ref, o_ref):
    """One batch tile: x[TB, IN] -> out[TB, OUT].

    Weights arrive pre-transposed [in, out] and zero-padded to lane-dense
    (128) internal sizes. MXU inputs use the weight dtype (f32 or bf16);
    accumulation and all element-wise math (bias add, sigmoid) stay in f32.
    The final store slices the 128-padded result down to the true output
    width, so no separate un-pad pass is needed outside the kernel.
    """
    w_dtype = w1_ref.dtype
    out_cols = o_ref.shape[1]  # true (unpadded) output feature count
    x = x_ref[...]

    # fc1 + sigmoid
    h = jnp.dot(x.astype(w_dtype), w1_ref[...], preferred_element_type=jnp.float32)
    h = jax.nn.sigmoid(h + b1_ref[...])
    # fc2 + sigmoid
    h = jnp.dot(h.astype(w_dtype), w2_ref[...], preferred_element_type=jnp.float32)
    h = jax.nn.sigmoid(h + b2_ref[...])
    # fc3 (no activation)
    out = jnp.dot(h.astype(w_dtype), w3_ref[...], preferred_element_type=jnp.float32)
    out = out + b3_ref[...]

    o_ref[...] = out[:, :out_cols].astype(o_ref.dtype)


# --------------------------------------------------------------------------
# One-time parameter preparation (outside the per-call forward path)
# --------------------------------------------------------------------------
def prepare_params(params, *, use_bf16=False):
    """Convert PyTorch-layout params (w: [out, in], b: [out]) into kernel
    layout: pre-transposed [in, out], zero-padded to lane-dense (128) hidden /
    output dims, weights optionally cast to bf16. Biases stay f32 (added after
    the f32 MXU accumulation). Call once; reuse across forward calls."""
    w1, b1, w2, b2, w3, b3 = params
    hidden = w1.shape[0]
    output = w3.shape[0]
    hp = _round_up(hidden, LANE)
    op = _round_up(output, LANE)
    w_dtype = jnp.bfloat16 if use_bf16 else jnp.float32

    def pad2(a, rows, cols):
        return jnp.pad(a, ((0, rows - a.shape[0]), (0, cols - a.shape[1])))

    # Zero padding keeps semantics exact: padded hidden units come out of
    # sigmoid as 0.5, but the corresponding (padded) ROWS of W2/W3 are zero,
    # so nothing leaks downstream; padded output columns are dropped at the
    # kernel's store.
    w1t = pad2(w1.T, w1.shape[1], hp).astype(w_dtype)   # [in, hp]
    w2t = pad2(w2.T, hp, hp).astype(w_dtype)            # [hp, hp]
    w3t = pad2(w3.T, hp, op).astype(w_dtype)            # [hp, op]
    b1p = jnp.pad(b1, (0, hp - hidden))[None, :].astype(jnp.float32)  # [1, hp]
    b2p = jnp.pad(b2, (0, hp - hidden))[None, :].astype(jnp.float32)  # [1, hp]
    b3p = jnp.pad(b3, (0, op - output))[None, :].astype(jnp.float32)  # [1, op]
    return (w1t, b1p, w2t, b2p, w3t, b3p)


# --------------------------------------------------------------------------
# Batch-tile selection
# --------------------------------------------------------------------------
def _pick_batch_tile(batch):
    """Pick a batch tile (multiple of 8) that (a) is large (512-1024 rows)
    when the batch is large -- this kernel is HBM/streaming bound and big
    tiles amortize the ~0.35us per-grid-step overhead -- and (b) yields at
    least 2 grid steps on mid-size batches so both v7x TensorCores get work
    and DMA/compute overlap exists."""
    if batch <= 16:
        return batch                       # single tile; block == full dim
    if batch > 2048:
        return 1024
    if batch > 512:
        return 512
    # 17..512: aim for exactly 2 grid steps.
    return min(_round_up(pl.cdiv(batch, 2), 8), _round_up(batch, 8))


# --------------------------------------------------------------------------
# Forward
# --------------------------------------------------------------------------
def _forward_impl(x, prepared, output_size):
    w1t, b1p, w2t, b2p, w3t, b3p = prepared
    batch, in_features = x.shape
    hp = w1t.shape[1]
    op = w3t.shape[1]
    w_itemsize = jnp.dtype(w1t.dtype).itemsize
    x_itemsize = jnp.dtype(x.dtype).itemsize

    tb = _pick_batch_tile(batch)
    grid = (pl.cdiv(batch, tb),)

    def resident(shape):
        # Same block every grid step -> DMA'd once, stays VMEM-resident.
        # Single-buffered: the block index never changes, so a second buffer
        # would only double VMEM use (matters on v7x's 64 MiB VMEM).
        return pl.BlockSpec(shape, lambda i: (0, 0), pipeline_mode=pl.Buffered(1))

    # VMEM budget: double-buffered x/out tiles + single-buffered weights/biases.
    weight_bytes = (in_features * hp + hp * hp + hp * op) * w_itemsize
    bias_bytes = (hp + hp + op) * 4
    stream_bytes = 2 * tb * (in_features + output_size) * x_itemsize
    vmem_limit = min(int(2 * (weight_bytes + bias_bytes + stream_bytes)) + (4 << 20),
                     128 << 20)

    cost = pl.CostEstimate(
        flops=2 * batch * (in_features * hp + hp * hp + hp * op),
        transcendentals=2 * batch * hp,
        bytes_accessed=(batch * in_features * x_itemsize
                        + batch * output_size * x_itemsize
                        + weight_bytes + bias_bytes),
    )

    out = pl.pallas_call(
        mlp_kernel,
        out_shape=jax.ShapeDtypeStruct((batch, output_size), x.dtype),
        grid=grid,
        in_specs=[
            pl.BlockSpec((tb, in_features), lambda i: (i, 0)),  # x: batch-tiled
            resident((in_features, hp)),                        # w1
            resident((1, hp)),                                  # b1
            resident((hp, hp)),                                 # w2
            resident((1, hp)),                                  # b2
            resident((hp, op)),                                 # w3
            resident((1, op)),                                  # b3
        ],
        # Store the true output width directly (block last dim == full dim is
        # legal); avoids a separate un-pad HBM pass and writes ~op/output_size
        # fewer output bytes.
        out_specs=pl.BlockSpec((tb, output_size), lambda i: (i, 0)),
        compiler_params=pltpu.CompilerParams(
            dimension_semantics=("parallel",),  # shard batch tiles across TCs
            vmem_limit_bytes=vmem_limit,
        ),
        cost_estimate=cost,
    )(x, w1t, b1p, w2t, b2p, w3t, b3p)

    return out


neural_net_forward = jax.jit(_forward_impl, static_argnames=("output_size",))


# --------------------------------------------------------------------------
# Init + reference (PyTorch conventions)
# --------------------------------------------------------------------------
def init_params(key, input_size, hidden_size, output_size):
    """nn.Linear default init: uniform(-1/sqrt(fan_in), 1/sqrt(fan_in))."""
    def linear(key, fan_in, fan_out):
        kw, kb = jax.random.split(key)
        bound = 1.0 / jnp.sqrt(fan_in)
        w = jax.random.uniform(kw, (fan_out, fan_in), jnp.float32, -bound, bound)
        b = jax.random.uniform(kb, (fan_out,), jnp.float32, -bound, bound)
        return w, b

    k1, k2, k3 = jax.random.split(key, 3)
    w1, b1 = linear(k1, input_size, hidden_size)
    w2, b2 = linear(k2, hidden_size, hidden_size)
    w3, b3 = linear(k3, hidden_size, output_size)
    return (w1, b1, w2, b2, w3, b3)


def reference_forward(x, params):
    """Pure-JAX reference of the PyTorch forward."""
    w1, b1, w2, b2, w3, b3 = params
    h = jax.nn.sigmoid(x @ w1.T + b1)
    h = jax.nn.sigmoid(h @ w2.T + b2)
    return h @ w3.T + b3


if __name__ == "__main__":
    input_size = 64
    hidden_size = 32
    output_size = 10

    key = jax.random.PRNGKey(0)
    kx, kp, kx2 = jax.random.split(key, 3)
    params = init_params(kp, input_size, hidden_size, output_size)
    prepared_f32 = prepare_params(params, use_bf16=False)
    prepared_bf16 = prepare_params(params, use_bf16=True)

    # --- small batch, single-tile grid, f32 path (exact check) -------------
    batch = 8
    x = jax.random.normal(kx, (batch, input_size), dtype=jnp.float32)
    ref = reference_forward(x, params)

    out = neural_net_forward(x, prepared_f32, output_size=output_size)
    out = jax.block_until_ready(out)
    assert out.shape == (batch, output_size)
    assert jnp.allclose(out, ref, atol=1e-4, rtol=1e-4), "f32 kernel mismatch vs reference"

    # --- bf16 streaming path: bf16 x and bf16 out, f32 accum/element-wise --
    x_bf16 = x.astype(jnp.bfloat16)
    out_bf16 = neural_net_forward(x_bf16, prepared_bf16, output_size=output_size)
    out_bf16 = jax.block_until_ready(out_bf16)
    assert out_bf16.shape == (batch, output_size)
    assert out_bf16.dtype == jnp.bfloat16
    assert jnp.allclose(out_bf16.astype(jnp.float32), ref, atol=1e-1, rtol=1e-1), (
        "bf16 kernel mismatch vs reference")

    # --- mid-size batch: multi-step grid + partial final tile, f32 path ----
    batch2 = 200  # tile picker -> tb=104, grid=2 (last tile partial: 96 rows)
    x2 = jax.random.normal(kx2, (batch2, input_size), dtype=jnp.float32)
    ref2 = reference_forward(x2, params)
    out2 = neural_net_forward(x2, prepared_f32, output_size=output_size)
    out2 = jax.block_until_ready(out2)
    assert out2.shape == (batch2, output_size)
    assert jnp.allclose(out2, ref2, atol=1e-4, rtol=1e-4), (
        "f32 kernel mismatch vs reference (multi-tile)")

    print("KERNEL_OK")
</pallas_src>

<mosaic_0001>
module attributes {stable_mosaic.version = 11 : i64} {
  func.func @mlp_kernel(%arg0: i32, %arg1: memref<8x64xf32, #tpu.memory_space<vmem>>, %arg2: memref<64x128xf32, #tpu.memory_space<vmem>>, %arg3: memref<1x128xf32, #tpu.memory_space<vmem>>, %arg4: memref<128x128xf32, #tpu.memory_space<vmem>>, %arg5: memref<1x128xf32, #tpu.memory_space<vmem>>, %arg6: memref<128x128xf32, #tpu.memory_space<vmem>>, %arg7: memref<1x128xf32, #tpu.memory_space<vmem>>, %arg8: memref<8x10xf32, #tpu.memory_space<vmem>>) attributes {dimension_semantics = [#tpu.dimension_semantics<parallel>], iteration_bounds = array<i64: 1>, scalar_prefetch = 0 : i64, scratch_operands = 0 : i64, tpu.core_type = #tpu.core_type<tc>, window_params = [{transform_indices = @transform_0, window_bounds = array<i64: 8, 64>}, {pipeline_mode = #tpu.pipeline_mode<synchronous>, transform_indices = @transform_1, window_bounds = array<i64: 64, 128>}, {pipeline_mode = #tpu.pipeline_mode<synchronous>, transform_indices = @transform_2, window_bounds = array<i64: 1, 128>}, {pipeline_mode = #tpu.pipeline_mode<synchronous>, transform_indices = @transform_3, window_bounds = array<i64: 128, 128>}, {pipeline_mode = #tpu.pipeline_mode<synchronous>, transform_indices = @transform_4, window_bounds = array<i64: 1, 128>}, {pipeline_mode = #tpu.pipeline_mode<synchronous>, transform_indices = @transform_5, window_bounds = array<i64: 128, 128>}, {pipeline_mode = #tpu.pipeline_mode<synchronous>, transform_indices = @transform_6, window_bounds = array<i64: 1, 128>}, {transform_indices = @transform_7, window_bounds = array<i64: 8, 10>}]} {
    %c0 = arith.constant 0 : index
    %c0_0 = arith.constant 0 : index
    %0 = vector.load %arg1[%c0, %c0_0] : memref<8x64xf32, #tpu.memory_space<vmem>>, vector<8x64xf32>
    %c0_1 = arith.constant 0 : index
    %c0_2 = arith.constant 0 : index
    %1 = vector.load %arg2[%c0_1, %c0_2] : memref<64x128xf32, #tpu.memory_space<vmem>>, vector<64x128xf32>
    %cst = arith.constant dense<0.000000e+00> : vector<8x128xf32>
    %2 = tpu.matmul %0, %1, %cst {dimension_numbers = #tpu.dot_dimension_numbers<[1], [0], [0], [1], [0, 0, 1, 1], [], []>} : vector<8x64xf32>, vector<64x128xf32>, vector<8x128xf32> -> vector<8x128xf32>
    %c0_3 = arith.constant 0 : index
    %c0_4 = arith.constant 0 : index
    %3 = vector.load %arg3[%c0_3, %c0_4] : memref<1x128xf32, #tpu.memory_space<vmem>>, vector<1x128xf32>
    %4 = vector.broadcast %3 : vector<1x128xf32> to vector<8x128xf32>
    %5 = arith.addf %2, %4 : vector<8x128xf32>
    %6 = arith.negf %5 : vector<8x128xf32>
    %7 = math.exp %6 : vector<8x128xf32>
    %cst_5 = arith.constant 1.000000e+00 : f32
    %8 = vector.broadcast %cst_5 : f32 to vector<8x128xf32>
    %9 = arith.addf %8, %7 : vector<8x128xf32>
    %10 = arith.divf %8, %9 : vector<8x128xf32>
    %c0_6 = arith.constant 0 : index
    %c0_7 = arith.constant 0 : index
    %11 = vector.load %arg4[%c0_6, %c0_7] : memref<128x128xf32, #tpu.memory_space<vmem>>, vector<128x128xf32>
    %cst_8 = arith.constant dense<0.000000e+00> : vector<8x128xf32>
    %12 = tpu.matmul %10, %11, %cst_8 {dimension_numbers = #tpu.dot_dimension_numbers<[1], [0], [0], [1], [0, 0, 1, 1], [], []>} : vector<8x128xf32>, vector<128x128xf32>, vector<8x128xf32> -> vector<8x128xf32>
    %c0_9 = arith.constant 0 : index
    %c0_10 = arith.constant 0 : index
    %13 = vector.load %arg5[%c0_9, %c0_10] : memref<1x128xf32, #tpu.memory_space<vmem>>, vector<1x128xf32>
    %14 = vector.broadcast %13 : vector<1x128xf32> to vector<8x128xf32>
    %15 = arith.addf %12, %14 : vector<8x128xf32>
    %16 = arith.negf %15 : vector<8x128xf32>
    %17 = math.exp %16 : vector<8x128xf32>
    %cst_11 = arith.constant 1.000000e+00 : f32
    %18 = vector.broadcast %cst_11 : f32 to vector<8x128xf32>
    %19 = arith.addf %18, %17 : vector<8x128xf32>
    %20 = arith.divf %18, %19 : vector<8x128xf32>
    %c0_12 = arith.constant 0 : index
    %c0_13 = arith.constant 0 : index
    %21 = vector.load %arg6[%c0_12, %c0_13] : memref<128x128xf32, #tpu.memory_space<vmem>>, vector<128x128xf32>
    %cst_14 = arith.constant dense<0.000000e+00> : vector<8x128xf32>
    %22 = tpu.matmul %20, %21, %cst_14 {dimension_numbers = #tpu.dot_dimension_numbers<[1], [0], [0], [1], [0, 0, 1, 1], [], []>} : vector<8x128xf32>, vector<128x128xf32>, vector<8x128xf32> -> vector<8x128xf32>
    %c0_15 = arith.constant 0 : index
    %c0_16 = arith.constant 0 : index
    %23 = vector.load %arg7[%c0_15, %c0_16] : memref<1x128xf32, #tpu.memory_space<vmem>>, vector<1x128xf32>
    %24 = vector.broadcast %23 : vector<1x128xf32> to vector<8x128xf32>
    %25 = arith.addf %22, %24 : vector<8x128xf32>
    %26 = vector.extract_strided_slice %25 {offsets = [0, 0], sizes = [8, 10], strides = [1, 1]} : vector<8x128xf32> to vector<8x10xf32>
    %c0_17 = arith.constant 0 : index
    %c0_18 = arith.constant 0 : index
    %27 = vector.load %arg8[%c0_17, %c0_18] : memref<8x10xf32, #tpu.memory_space<vmem>>, vector<8x10xf32>
    tpu.vector_store %arg8[%c0_17, %c0_18], %26 {strides = array<i32>} : memref<8x10xf32, #tpu.memory_space<vmem>>, vector<8x10xf32>,
    return
  }
  func.func @transform_0(%arg0: i32) -> (i32, i32) {
    %c0_i32 = arith.constant 0 : i32
    %c0_i32_0 = arith.constant 0 : i32
    return %arg0, %c0_i32 : i32, i32
  }
  func.func @transform_1(%arg0: i32) -> (i32, i32) {
    %c0_i32 = arith.constant 0 : i32
    %c0_i32_0 = arith.constant 0 : i32
    %c0_i32_1 = arith.constant 0 : i32
    return %c0_i32, %c0_i32_0 : i32, i32
  }
  func.func @transform_2(%arg0: i32) -> (i32, i32) {
    %c0_i32 = arith.constant 0 : i32
    %c0_i32_0 = arith.constant 0 : i32
    %c0_i32_1 = arith.constant 0 : i32
    return %c0_i32, %c0_i32_0 : i32, i32
  }
  func.func @transform_3(%arg0: i32) -> (i32, i32) {
    %c0_i32 = arith.constant 0 : i32
    %c0_i32_0 = arith.constant 0 : i32
    %c0_i32_1 = arith.constant 0 : i32
    return %c0_i32, %c0_i32_0 : i32, i32
  }
  func.func @transform_4(%arg0: i32) -> (i32, i32) {
    %c0_i32 = arith.constant 0 : i32
    %c0_i32_0 = arith.constant 0 : i32
    %c0_i32_1 = arith.constant 0 : i32
    return %c0_i32, %c0_i32_0 : i32, i32
  }
  func.func @transform_5(%arg0: i32) -> (i32, i32) {
    %c0_i32 = arith.constant 0 : i32
    %c0_i32_0 = arith.constant 0 : i32
    %c0_i32_1 = arith.constant 0 : i32
    return %c0_i32, %c0_i32_0 : i32, i32
  }
  func.func @transform_6(%arg0: i32) -> (i32, i32) {
    %c0_i32 = arith.constant 0 : i32
    %c0_i32_0 = arith.constant 0 : i32
    %c0_i32_1 = arith.constant 0 : i32
    return %c0_i32, %c0_i32_0 : i32, i32
  }
  func.func @transform_7(%arg0: i32) -> (i32, i32) {
    %c0_i32 = arith.constant 0 : i32
    %c0_i32_0 = arith.constant 0 : i32
    return %arg0, %c0_i32 : i32, i32
  }
}

</mosaic_0001>

<llo_original>
// kernel: _forward_impl.1
$region0: #{_forward_impl.1}
  #allocation0 [shape = 'u32[]', space=smem, size = 0x4, offset = 0x4, fixed_abs, tag = 'smem constant byte address 0x4 - core index']
  #allocation1 [shape = 'u32[144,128]{1,0:T(1,128)}', space=vmem, size = 0x12000, scoped, tag = 'internal scratch']
  %s0 = inlined_call_operand.hbm [shape: f32[8,64], index: 0, kind: input, shape index: {}]
  %s1 = inlined_call_operand.hbm [shape: f32[64,128], index: 1, kind: input, shape index: {}]
  %s2 = inlined_call_operand.vmem [shape: f32[1,128], index: 2, kind: input, shape index: {}]
  %s3 = inlined_call_operand.hbm [shape: f32[128,128], index: 3, kind: input, shape index: {}]
  %s4 = inlined_call_operand.vmem [shape: f32[1,128], index: 4, kind: input, shape index: {}]
  %s5 = inlined_call_operand.hbm [shape: f32[128,128], index: 5, kind: input, shape index: {}]
  %s6 = inlined_call_operand.vmem [shape: f32[1,128], index: 6, kind: input, shape index: {}]
  %s7 = inlined_call_operand.hbm [shape: f32[8,10], index: 7, kind: output, shape index: {}]
  %s8 = sld [smem:[#allocation0]]
  $region54: #{_forward_impl.1} parent=0
    _
  %s10 = ssub.s32 1, %s8
  %s11 = scalar_select 0, %s10, %s8
  $region1: #{_forward_impl.1} parent=0
    #allocation2 [shape = 'u8[4096]{0}', space=vmem, size = 0x1000, scoped, tag = 'input window, operand 0, single buffered']
    #allocation3 [shape = 's32[1]{0}', space=sflag, size = 0x4, scoped, tag = 'scoped memory for _forward_impl.1']
    #allocation4 [shape = 's32[1]{0}', space=sflag, size = 0x4, scoped, tag = 'scoped memory for _forward_impl.1']
    #allocation5 [shape = 'u8[32768]{0}', space=vmem, size = 0x8000, scoped, tag = 'input window, operand 1, single buffered']
    #allocation6 [shape = 's32[1]{0}', space=sflag, size = 0x4, scoped, tag = 'scoped memory for _forward_impl.1']
    #allocation7 [shape = 'u8[65536]{0}', space=vmem, size = 0x10000, scoped, tag = 'input window, operand 3, single buffered']
    #allocation8 [shape = 'u8[65536]{0}', space=vmem, size = 0x10000, scoped, tag = 'input window, operand 5, single buffered']
    #allocation9 [shape = 's32[1]{0}', space=sflag, size = 0x4, scoped, tag = 'scoped memory for _forward_impl.1']
    #allocation10 [shape = 'u8[4096]{0}', space=vmem, size = 0x1000, scoped, tag = 'output window, operand 0, single buffered']
    %12 = vsyncpa [#allocation3], 0
    %13 = vsyncpa [#allocation6], 0
    %14 = vsyncpa [#allocation9], 0
    %15 = vsyncpa [#allocation4], 0
    // Predicated region
    $region2: #{_forward_impl.1} parent=1 // pred_check
      _
    $region3: #{_forward_impl.1} parent=1 // pred_check_branch
      %17 = sbr.rel (0) target = $region5
    $region4: #{_forward_impl.1} parent=1 // pred_region
      %s19 = ssub.s32 128, 128
      %20 = vsyncadd [#allocation3], %s19
      %s22 = sshll.u32 [#allocation2], 4
      %s23 = int_to_ptr.vmem [resolvable:$true] %s22
      %25 = dma.hbm_to_vmem [thread:$0]  %s0, 128, %s23, [#allocation3]
    $region5: #{_forward_impl.1} parent=1 // pred_fallthru
      _
    // Predicated region
    $region6: #{_forward_impl.1} parent=1 // pred_check
      _
    $region7: #{_forward_impl.1} parent=1 // pred_check_branch
      %27 = sbr.rel (0) target = $region9
    $region8: #{_forward_impl.1} parent=1 // pred_region
      %s29 = ssub.s32 1024, 1024
      %30 = vsyncadd [#allocation6], %s29
      %s31 = sshll.u32 [#allocation5], 4
      %s32 = int_to_ptr.vmem [resolvable:$true] %s31
      %37 = dma.hbm_to_vmem [thread:$0]  %s1, 1024, %s32, [#allocation6], 128, 128, 8
    $region9: #{_forward_impl.1} parent=1 // pred_fallthru
      _
    // Predicated region
    $region10: #{_forward_impl.1} parent=1 // pred_check
      _
    $region11: #{_forward_impl.1} parent=1 // pred_check_branch
      %39 = sbr.rel (0) target = $region13
    $region12: #{_forward_impl.1} parent=1 // pred_region
      _
    $region13: #{_forward_impl.1} parent=1 // pred_fallthru
      _
    // Predicated region
    $region14: #{_forward_impl.1} parent=1 // pred_check
      _
    $region15: #{_forward_impl.1} parent=1 // pred_check_branch
      %41 = sbr.rel (0) target = $region17
    $region16: #{_forward_impl.1} parent=1 // pred_region
      %s43 = ssub.s32 2048, 2048
      %44 = vsyncadd [#allocation6], %s43
      %s45 = sshll.u32 [#allocation7], 4
      %s46 = int_to_ptr.vmem [resolvable:$true] %s45
      %51 = dma.hbm_to_vmem [thread:$0]  %s3, 2048, %s46, [#allocation6], 128, 128, 8
    $region17: #{_forward_impl.1} parent=1 // pred_fallthru
      _
    // Predicated region
    $region18: #{_forward_impl.1} parent=1 // pred_check
      _
    $region19: #{_forward_impl.1} parent=1 // pred_check_branch
      %53 = sbr.rel (0) target = $region21
    $region20: #{_forward_impl.1} parent=1 // pred_region
      _
    $region21: #{_forward_impl.1} parent=1 // pred_fallthru
      _
    // Predicated region
    $region22: #{_forward_impl.1} parent=1 // pred_check
      _
    $region23: #{_forward_impl.1} parent=1 // pred_check_branch
      %55 = sbr.rel (0) target = $region25
    $region24: #{_forward_impl.1} parent=1 // pred_region
      %s57 = ssub.s32 2048, 2048
      %58 = vsyncadd [#allocation9], %s57
      %s59 = sshll.u32 [#allocation8], 4
      %s60 = int_to_ptr.vmem [resolvable:$true] %s59
      %65 = dma.hbm_to_vmem [thread:$0]  %s5, 2048, %s60, [#allocation9], 128, 128, 8
    $region25: #{_forward_impl.1} parent=1 // pred_fallthru
      _
    // Predicated region
    $region26: #{_forward_impl.1} parent=1 // pred_check
      _
    $region27: #{_forward_impl.1} parent=1 // pred_check_branch
      %67 = sbr.rel (0) target = $region29
    $region28: #{_forward_impl.1} parent=1 // pred_region
      _
    $region29: #{_forward_impl.1} parent=1 // pred_fallthru
      _
    // Predicated region
    $region30: #{_forward_impl.1} parent=1 // pred_check
      _
    $region31: #{_forward_impl.1} parent=1 // pred_check_branch
      %69 = sbr.rel (0) target = $region33
    $region32: #{_forward_impl.1} parent=1 // pred_region
      %70 = dma.done [#allocation3], 128
    $region33: #{_forward_impl.1} parent=1 // pred_fallthru
      _
    // Predicated region
    $region34: #{_forward_impl.1} parent=1 // pred_check
      _
    $region35: #{_forward_impl.1} parent=1 // pred_check_branch
      %72 = sbr.rel (0) target = $region37
    $region36: #{_forward_impl.1} parent=1 // pred_region
      %73 = dma.done [#allocation6], 1024
    $region37: #{_forward_impl.1} parent=1 // pred_fallthru
      _
    // Predicated region
    $region38: #{_forward_impl.1} parent=1 // pred_check
      _
    $region39: #{_forward_impl.1} parent=1 // pred_check_branch
      %75 = sbr.rel (0) target = $region41
    $region40: #{_forward_impl.1} parent=1 // pred_region
      %76 = dma.done [#allocation6], 2048
    $region41: #{_forward_impl.1} parent=1 // pred_fallthru
      _
    // Predicated region
    $region42: #{_forward_impl.1} parent=1 // pred_check
      _
    $region43: #{_forward_impl.1} parent=1 // pred_check_branch
      %78 = sbr.rel (0) target = $region45
    $region44: #{_forward_impl.1} parent=1 // pred_region
      %79 = dma.done [#allocation9], 2048
    $region45: #{_forward_impl.1} parent=1 // pred_fallthru
      _
    %v80 = vld [vmem:[#allocation2] sm:$0xff]
    %v81 = vld [vmem:[#allocation5] sm:$0xff]
    %v82 = vld [vmem:[#allocation5 + $0x8] sm:$0xff]
    %v83 = vld [vmem:[#allocation5 + $0x10] sm:$0xff]
    %v84 = vld [vmem:[#allocation5 + $0x18] sm:$0xff]
    %v85 = vld [vmem:[#allocation5 + $0x20] sm:$0xff]
    %v86 = vld [vmem:[#allocation5 + $0x28] sm:$0xff]
    %v87 = vld [vmem:[#allocation5 + $0x30] sm:$0xff]
    %v88 = vld [vmem:[#allocation5 + $0x38] sm:$0xff]
    %v89 = vld [vmem:[%s2] sm:$0x1]
    %v91 = vlaneseq
    %v92 = vshrl.u32 %v91, 7
    %v93 = vsub.s32 0, %v92
    %v94 = vrot.slane %v89, %v93
    %vm96 = vcmask 523264
    %v98 = vsel %vm96, %v80, 0
    %100 = vmatprep.subr.mxu0 0.0
    %101 = vmatpush1.msra.mxu0 %v81
    %102 = vmatprep.subr.mxu0 0.0
    %103 = vmatpush1.msra.mxu0 %v82
    %104 = vmatprep.subr.mxu0 0.0
    %105 = vmatpush1.msra.mxu0 %v83
    %106 = vmatprep.subr.mxu0 0.0
    %107 = vmatpush1.msra.mxu0 %v84
    %108 = vmatprep.subr.mxu0 0.0
    %109 = vmatpush1.msra.mxu0 %v85
    %110 = vmatprep.subr.mxu0 0.0
    %111 = vmatpush1.msra.mxu0 %v86
    %112 = vmatprep.subr.mxu0 0.0
    %113 = vmatpush1.msra.mxu0 %v87
    %114 = vmatprep.subr.mxu0 0.0
    %115 = vmatpush1.msra.mxu0 %v88
    %116 = vmatprep.subr.mxu0 0.0
    %117 = vmatpush1.msra.mxu0 0.0
    %118 = vmatprep.subr.mxu0 0.0
    %119 = vmatpush1.msra.mxu0 0.0
    %120 = vmatprep.subr.mxu0 0.0
    %121 = vmatpush1.msra.mxu0 0.0
    %122 = vmatprep.subr.mxu0 0.0
    %123 = vmatpush1.msra.mxu0 0.0
    %124 = vmatprep.subr.mxu0 0.0
    %125 = vmatpush1.msra.mxu0 0.0
    %126 = vmatprep.subr.mxu0 0.0
    %127 = vmatpush1.msra.mxu0 0.0
    %128 = vmatprep.subr.mxu0 0.0
    %129 = vmatpush1.msra.mxu0 0.0
    %130 = vmatprep.subr.mxu0 0.0
    %131 = vmatpush1.msra.mxu0 0.0
    %132 = vmatprep.subr.mxu0 0.0
    %133 = vmatpush1.msra.mxu0 0.0
    %134 = vmatprep.subr.mxu0 0.0
    %135 = vmatpush1.msra.mxu0 0.0
    %136 = vmatprep.subr.mxu0 0.0
    %137 = vmatpush1.msra.mxu0 0.0
    %138 = vmatprep.subr.mxu0 0.0
    %139 = vmatpush1.msra.mxu0 0.0
    %140 = vmatprep.subr.mxu0 0.0
    %141 = vmatpush1.msra.mxu0 0.0
    %142 = vmatprep.subr.mxu0 0.0
    %143 = vmatpush1.msra.mxu0 0.0
    %144 = vmatprep.subr.mxu0 0.0
    %145 = vmatpush1.msra.mxu0 0.0
    %146 = vmatprep.subr.mxu0 0.0
    %147 = vmatpush1.msra.mxu0 0.0
    %148 = vmatprep.subr.mxu0 0.0
    %149 = vmatpush1.msra.mxu0 0.0
    %150 = vmatprep.subr.mxu0 0.0
    %151 = vmatpush1.msra.mxu0 0.0
    %152 = vmatprep.subr.mxu0 0.0
    %153 = vmatpush1.msra.mxu0 0.0
    %154 = vmatprep.subr.mxu0 0.0
    %155 = vmatpush1.msra.mxu0 0.0
    %156 = vmatprep.subr.mxu0 0.0
    %157 = vmatpush1.msra.mxu0 0.0
    %158 = vmatprep.subr.mxu0 0.0
    %159 = vmatpush1.msra.mxu0 0.0
    %160 = vmatprep.subr.mxu0 0.0
    %161 = vmatpush1.msra.mxu0 0.0
    %162 = vmatprep.subr.mxu0 0.0
    %163 = vmatpush1.msra.mxu0 0.0
    %164 = vmatprep.mubr.f32.mxu0 0.0
    %165 = vmatmul.mubr.f32.gmra.mrb[0].mxu0 %v98
    %v166 = vpop.f32.mrb[0].mxu0
    %v167 = vadd.f32 %v94, %v166
    %v168 = vpop.f32.mrb[0].mxu0
    %169 = vdwg.mxu0
    %v170 = vxor.u32 %v167, 2147483648
    %v171 = vmul.f32 %v170, 1.442695
    %v172 = vpow.pop %v171
    %v173 = vadd.f32 %v172, 1.0
    %v174 = vrcp.pop %v173
    %v175 = vmul.f32 1.0, %v174
    %v176 = vld [vmem:[#allocation7] sm:$0xff]
    %v177 = vld [vmem:[#allocation7 + $0x8] sm:$0xff]
    %v178 = vld [vmem:[#allocation7 + $0x10] sm:$0xff]
    %v179 = vld [vmem:[#allocation7 + $0x18] sm:$0xff]
    %v180 = vld [vmem:[#allocation7 + $0x20] sm:$0xff]
    %v181 = vld [vmem:[#allocation7 + $0x28] sm:$0xff]
    %v182 = vld [vmem:[#allocation7 + $0x30] sm:$0xff]
    %v183 = vld [vmem:[#allocation7 + $0x38] sm:$0xff]
    %v184 = vld [vmem:[#allocation7 + $0x40] sm:$0xff]
    %v185 = vld [vmem:[#allocation7 + $0x48] sm:$0xff]
    %v186 = vld [vmem:[#allocation7 + $0x50] sm:$0xff]
    %v187 = vld [vmem:[#allocation7 + $0x58] sm:$0xff]
    %v188 = vld [vmem:[#allocation7 + $0x60] sm:$0xff]
    %v189 = vld [vmem:[#allocation7 + $0x68] sm:$0xff]
    %v190 = vld [vmem:[#allocation7 + $0x70] sm:$0xff]
    %v191 = vld [vmem:[#allocation7 + $0x78] sm:$0xff]
    %v192 = vld [vmem:[%s4] sm:$0x1]
    %v194 = vlaneseq
    %v195 = vshrl.u32 %v194, 7
    %v196 = vsub.s32 0, %v195
    %v197 = vrot.slane %v192, %v196
    %199 = vmatprep.subr.mxu0 0.0
    %200 = vmatpush1.msra.mxu0 %v176
    %201 = vmatprep.subr.mxu0 0.0
    %202 = vmatpush1.msra.mxu0 %v177
    %203 = vmatprep.subr.mxu0 0.0
    %204 = vmatpush1.msra.mxu0 %v178
    %205 = vmatprep.subr.mxu0 0.0
    %206 = vmatpush1.msra.mxu0 %v179
    %207 = vmatprep.subr.mxu0 0.0
    %208 = vmatpush1.msra.mxu0 %v180
    %209 = vmatprep.subr.mxu0 0.0
    %210 = vmatpush1.msra.mxu0 %v181
    %211 = vmatprep.subr.mxu0 0.0
    %212 = vmatpush1.msra.mxu0 %v182
    %213 = vmatprep.subr.mxu0 0.0
    %214 = vmatpush1.msra.mxu0 %v183
    %215 = vmatprep.subr.mxu0 0.0
    %216 = vmatpush1.msra.mxu0 %v184
    %217 = vmatprep.subr.mxu0 0.0
    %218 = vmatpush1.msra.mxu0 %v185
    %219 = vmatprep.subr.mxu0 0.0
    %220 = vmatpush1.msra.mxu0 %v186
    %221 = vmatprep.subr.mxu0 0.0
    %222 = vmatpush1.msra.mxu0 %v187
    %223 = vmatprep.subr.mxu0 0.0
    %224 = vmatpush1.msra.mxu0 %v188
    %225 = vmatprep.subr.mxu0 0.0
    %226 = vmatpush1.msra.mxu0 %v189
    %227 = vmatprep.subr.mxu0 0.0
    %228 = vmatpush1.msra.mxu0 %v190
    %229 = vmatprep.subr.mxu0 0.0
    %230 = vmatpush1.msra.mxu0 %v191
    %231 = vmatprep.subr.mxu0 0.0
    %232 = vmatpush1.msra.mxu0 0.0
    %233 = vmatprep.subr.mxu0 0.0
    %234 = vmatpush1.msra.mxu0 0.0
    %235 = vmatprep.subr.mxu0 0.0
    %236 = vmatpush1.msra.mxu0 0.0
    %237 = vmatprep.subr.mxu0 0.0
    %238 = vmatpush1.msra.mxu0 0.0
    %239 = vmatprep.subr.mxu0 0.0
    %240 = vmatpush1.msra.mxu0 0.0
    %241 = vmatprep.subr.mxu0 0.0
    %242 = vmatpush1.msra.mxu0 0.0
    %243 = vmatprep.subr.mxu0 0.0
    %244 = vmatpush1.msra.mxu0 0.0
    %245 = vmatprep.subr.mxu0 0.0
    %246 = vmatpush1.msra.mxu0 0.0
    %247 = vmatprep.subr.mxu0 0.0
    %248 = vmatpush1.msra.mxu0 0.0
    %249 = vmatprep.subr.mxu0 0.0
    %250 = vmatpush1.msra.mxu0 0.0
    %251 = vmatprep.subr.mxu0 0.0
    %252 = vmatpush1.msra.mxu0 0.0
    %253 = vmatprep.subr.mxu0 0.0
    %254 = vmatpush1.msra.mxu0 0.0
    %255 = vmatprep.subr.mxu0 0.0
    %256 = vmatpush1.msra.mxu0 0.0
    %257 = vmatprep.subr.mxu0 0.0
    %258 = vmatpush1.msra.mxu0 0.0
    %259 = vmatprep.subr.mxu0 0.0
    %260 = vmatpush1.msra.mxu0 0.0
    %261 = vmatprep.subr.mxu0 0.0
    %262 = vmatpush1.msra.mxu0 0.0
    %263 = vmatprep.mubr.f32.mxu0 0.0
    %264 = vmatmul.mubr.f32.gmra.mrb[0].mxu0 %v175
    %v265 = vpop.f32.mrb[0].mxu0
    %v266 = vadd.f32 %v197, %v265
    %v267 = vpop.f32.mrb[0].mxu0
    %268 = vdwg.mxu0
    %v269 = vxor.u32 %v266, 2147483648
    %v270 = vmul.f32 %v269, 1.442695
    %v271 = vpow.pop %v270
    %v272 = vadd.f32 %v271, 1.0
    %v273 = vrcp.pop %v272
    %v274 = vmul.f32 1.0, %v273
    %v275 = vld [vmem:[#allocation8] sm:$0xff]
    %v276 = vld [vmem:[#allocation8 + $0x8] sm:$0xff]
    %v277 = vld [vmem:[#allocation8 + $0x10] sm:$0xff]
    %v278 = vld [vmem:[#allocation8 + $0x18] sm:$0xff]
    %v279 = vld [vmem:[#allocation8 + $0x20] sm:$0xff]
    %v280 = vld [vmem:[#allocation8 + $0x28] sm:$0xff]
    %v281 = vld [vmem:[#allocation8 + $0x30] sm:$0xff]
    %v282 = vld [vmem:[#allocation8 + $0x38] sm:$0xff]
    %v283 = vld [vmem:[#allocation8 + $0x40] sm:$0xff]
    %v284 = vld [vmem:[#allocation8 + $0x48] sm:$0xff]
    %v285 = vld [vmem:[#allocation8 + $0x50] sm:$0xff]
    %v286 = vld [vmem:[#allocation8 + $0x58] sm:$0xff]
    %v287 = vld [vmem:[#allocation8 + $0x60] sm:$0xff]
    %v288 = vld [vmem:[#allocation8 + $0x68] sm:$0xff]
    %v289 = vld [vmem:[#allocation8 + $0x70] sm:$0xff]
    %v290 = vld [vmem:[#allocation8 + $0x78] sm:$0xff]
    %v291 = vld [vmem:[%s6] sm:$0x1]
    %v293 = vlaneseq
    %v294 = vshrl.u32 %v293, 7
    %v295 = vsub.s32 0, %v294
    %v296 = vrot.slane %v291, %v295
    %298 = vmatprep.subr.mxu0 0.0
    %299 = vmatpush1.msra.mxu0 %v275
    %300 = vmatprep.subr.mxu0 0.0
    %301 = vmatpush1.msra.mxu0 %v276
    %302 = vmatprep.subr.mxu0 0.0
    %303 = vmatpush1.msra.mxu0 %v277
    %304 = vmatprep.subr.mxu0 0.0
    %305 = vmatpush1.msra.mxu0 %v278
    %306 = vmatprep.subr.mxu0 0.0
    %307 = vmatpush1.msra.mxu0 %v279
    %308 = vmatprep.subr.mxu0 0.0
    %309 = vmatpush1.msra.mxu0 %v280
    %310 = vmatprep.subr.mxu0 0.0
    %311 = vmatpush1.msra.mxu0 %v281
    %312 = vmatprep.subr.mxu0 0.0
    %313 = vmatpush1.msra.mxu0 %v282
    %314 = vmatprep.subr.mxu0 0.0
    %315 = vmatpush1.msra.mxu0 %v283
    %316 = vmatprep.subr.mxu0 0.0
    %317 = vmatpush1.msra.mxu0 %v284
    %318 = vmatprep.subr.mxu0 0.0
    %319 = vmatpush1.msra.mxu0 %v285
    %320 = vmatprep.subr.mxu0 0.0
    %321 = vmatpush1.msra.mxu0 %v286
    %322 = vmatprep.subr.mxu0 0.0
    %323 = vmatpush1.msra.mxu0 %v287
    %324 = vmatprep.subr.mxu0 0.0
    %325 = vmatpush1.msra.mxu0 %v288
    %326 = vmatprep.subr.mxu0 0.0
    %327 = vmatpush1.msra.mxu0 %v289
    %328 = vmatprep.subr.mxu0 0.0
    %329 = vmatpush1.msra.mxu0 %v290
    %330 = vmatprep.subr.mxu0 0.0
    %331 = vmatpush1.msra.mxu0 0.0
    %332 = vmatprep.subr.mxu0 0.0
    %333 = vmatpush1.msra.mxu0 0.0
    %334 = vmatprep.subr.mxu0 0.0
    %335 = vmatpush1.msra.mxu0 0.0
    %336 = vmatprep.subr.mxu0 0.0
    %337 = vmatpush1.msra.mxu0 0.0
    %338 = vmatprep.subr.mxu0 0.0
    %339 = vmatpush1.msra.mxu0 0.0
    %340 = vmatprep.subr.mxu0 0.0
    %341 = vmatpush1.msra.mxu0 0.0
    %342 = vmatprep.subr.mxu0 0.0
    %343 = vmatpush1.msra.mxu0 0.0
    %344 = vmatprep.subr.mxu0 0.0
    %345 = vmatpush1.msra.mxu0 0.0
    %346 = vmatprep.subr.mxu0 0.0
    %347 = vmatpush1.msra.mxu0 0.0
    %348 = vmatprep.subr.mxu0 0.0
    %349 = vmatpush1.msra.mxu0 0.0
    %350 = vmatprep.subr.mxu0 0.0
    %351 = vmatpush1.msra.mxu0 0.0
    %352 = vmatprep.subr.mxu0 0.0
    %353 = vmatpush1.msra.mxu0 0.0
    %354 = vmatprep.subr.mxu0 0.0
    %355 = vmatpush1.msra.mxu0 0.0
    %356 = vmatprep.subr.mxu0 0.0
    %357 = vmatpush1.msra.mxu0 0.0
    %358 = vmatprep.subr.mxu0 0.0
    %359 = vmatpush1.msra.mxu0 0.0
    %360 = vmatprep.subr.mxu0 0.0
    %361 = vmatpush1.msra.mxu0 0.0
    %362 = vmatprep.mubr.f32.mxu0 0.0
    %363 = vmatmul.mubr.f32.gmra.mrb[0].mxu0 %v274
    %v364 = vpop.f32.mrb[0].mxu0
    %v365 = vadd.f32 %v296, %v364
    %v366 = vpop.f32.mrb[0].mxu0
    %367 = vdwg.mxu0
    %vm368 = vcmask 80896
    %369 = vst.msk [vmem:[#allocation10] sm:$0xff] %vm368, %v365
    // Predicated region
    $region46: #{_forward_impl.1} parent=1 // pred_check
      _
    $region47: #{_forward_impl.1} parent=1 // pred_check_branch
      %371 = sbr.rel (0) target = $region49
    $region48: #{_forward_impl.1} parent=1 // pred_region
      %s373 = ssub.s32 128, 128
      %374 = vsyncadd [#allocation4], %s373
      %s376 = sshll.u32 [#allocation10], 4
      %s377 = int_to_ptr.vmem [resolvable:$true] %s376
      %379 = dma.vmem_to_hbm [thread:$0]  %s377, 128, %s7, [#allocation4]
    $region49: #{_forward_impl.1} parent=1 // pred_fallthru
      _
    // Predicated region
    $region50: #{_forward_impl.1} parent=1 // pred_check
      _
    $region51: #{_forward_impl.1} parent=1 // pred_check_branch
      %381 = sbr.rel (0) target = $region53
    $region52: #{_forward_impl.1} parent=1 // pred_region
      %382 = dma.done [#allocation4], 128
    $region53: #{_forward_impl.1} parent=1 // pred_fallthru
      _
    %383 = vsyncpa [#allocation3], 1
    %384 = vsyncpa [#allocation6], 1
    %385 = vsyncpa [#allocation9], 1
    %386 = vsyncpa [#allocation4], 1

</llo_original>
